<compile_context>
chip_gen: v6e
topology: v6e:2x2x1
jax: 0.10.0
libtpu: 0.0.40
codegen_flags: <defaults>
</compile_context>

<pallas_src>
import jax
import jax.numpy as jnp
from jax.experimental import pallas as pl
from jax.experimental.pallas import tpu as pltpu


def _round_up(n, m):
    return ((n + m - 1) // m) * m


def _tile_byte_budget():
    # ~4 MiB tiles sit on the measured elementwise HBM-roofline plateau
    # (~86% on v6e). Keep the live footprint (in + out, double-buffered
    # ~= 4x tile bytes) well inside VMEM on every generation.
    try:
        cap = pltpu.get_tpu_info().vmem_capacity_bytes
    except Exception:
        cap = 64 * 1024 * 1024
    return max(512 * 1024, min(4 * 1024 * 1024, cap // 16))


def _pick_lane(n):
    # Widest lane-dense last dim (multiple of 128) that divides n exactly.
    for lane in (8192, 4096, 2048, 1024, 512, 256, 128):
        if n % lane == 0:
            return lane
    return None  # ragged size: needs padding to a 128 multiple


def _scarelu_kernel(slope_ref, x_ref, o_ref):
    # slope_ref: (1,) f32 scalar in SMEM; x_ref/o_ref: (tm, lane) VMEM tiles.
    s = slope_ref[0]
    o_ref[...] = (jnp.maximum(x_ref[...], 0) * s).astype(o_ref.dtype)


def _run_2d(x2d, slope_arr, tm):
    rows, lane = x2d.shape
    itemsize = jnp.dtype(x2d.dtype).itemsize
    n = rows * lane
    grid = (pl.cdiv(rows, tm),)
    return pl.pallas_call(
        _scarelu_kernel,
        out_shape=jax.ShapeDtypeStruct((rows, lane), x2d.dtype),
        grid_spec=pl.GridSpec(
            grid=grid,
            in_specs=[
                pl.BlockSpec(memory_space=pltpu.MemorySpace.SMEM),  # slope
                pl.BlockSpec((tm, lane), lambda i: (i, 0)),
            ],
            out_specs=pl.BlockSpec((tm, lane), lambda i: (i, 0)),
        ),
        compiler_params=pltpu.CompilerParams(
            dimension_semantics=("parallel",),
            vmem_limit_bytes=32 * 1024 * 1024,
        ),
        cost_estimate=pl.CostEstimate(
            flops=2 * n, transcendentals=0, bytes_accessed=2 * n * itemsize),
    )(slope_arr, x2d)


def sca_relu(x, slope):
    """Elementwise slope * relu(x) for an arbitrarily-shaped array."""
    orig_shape = x.shape
    dtype = x.dtype
    n = x.size
    if n == 0:
        return x

    itemsize = jnp.dtype(dtype).itemsize
    sublane = {4: 8, 2: 16, 1: 32}.get(itemsize, 8)
    slope_arr = jnp.asarray(slope, jnp.float32).reshape(1)

    lane = _pick_lane(n)
    if lane is not None:
        # Fast path: metadata-only reshape, no pad, no trailing slice.
        rows = n // lane
        padded = False
    else:
        # Ragged fallback: one pad to a lane multiple + one trailing slice.
        lane = 128
        rows = pl.cdiv(n, lane)
        padded = True

    # Row tile from the byte budget, rounded to the packed sublane tile.
    budget = _tile_byte_budget()
    tm = max(sublane, (budget // (lane * itemsize)) // sublane * sublane)
    if rows <= tm:
        if rows > 2 * sublane:
            # Split into >=2 tiles so v7x can shard the grid across its 2 TCs.
            tm = _round_up(pl.cdiv(rows, 2), sublane)
        else:
            tm = rows  # single block == full array dims (always legal)

    if padded:
        flat = jnp.pad(x.reshape(-1), (0, rows * lane - n))
        x2d = flat.reshape(rows, lane)
    else:
        x2d = x.reshape(rows, lane)

    out2d = _run_2d(x2d, slope_arr, tm)

    if padded:
        return out2d.reshape(-1)[:n].reshape(orig_shape)
    return out2d.reshape(orig_shape)


def reference_sca_relu(x, slope):
    return slope * jnp.maximum(x, 0)


if __name__ == "__main__":
    slope = 1.5
    batch, channels, height, width = 2, 4, 16, 16

    key = jax.random.PRNGKey(0)
    x = jax.random.normal(key, (batch, channels, height, width),
                          dtype=jnp.float32)

    out = jax.block_until_ready(sca_relu(x, slope))
    ref = reference_sca_relu(x, slope)
    assert out.shape == x.shape
    assert jnp.allclose(out, ref, atol=1e-6, rtol=1e-6), "mismatch vs reference"

    # Ragged size: exercises the pad + slice fallback path.
    x2 = jax.random.normal(jax.random.PRNGKey(0), (3, 5, 7), dtype=jnp.float32)
    out2 = jax.block_until_ready(sca_relu(x2, slope))
    assert jnp.allclose(out2, reference_sca_relu(x2, slope),
                        atol=1e-6, rtol=1e-6), "mismatch vs reference (ragged)"

    print("KERNEL_OK")
</pallas_src>

<mosaic_0001>
module attributes {stable_mosaic.version = 11 : i64} {
  func.func @_scarelu_kernel(%arg0: i32, %arg1: memref<1xf32, #tpu.memory_space<smem>>, %arg2: memref<1x2048xf32, #tpu.memory_space<vmem>>, %arg3: memref<1x2048xf32, #tpu.memory_space<vmem>>) attributes {dimension_semantics = [#tpu.dimension_semantics<parallel>], iteration_bounds = array<i64: 1>, scalar_prefetch = 0 : i64, scratch_operands = 0 : i64, tpu.core_type = #tpu.core_type<tc>, window_params = [{transform_indices = @transform_0, window_bounds = array<i64: 1>}, {transform_indices = @transform_1, window_bounds = array<i64: 1, 2048>}, {transform_indices = @transform_2, window_bounds = array<i64: 1, 2048>}]} {
    %c0 = arith.constant 0 : index
    %0 = memref.load %arg1[%c0] : memref<1xf32, #tpu.memory_space<smem>>
    %c0_0 = arith.constant 0 : index
    %c0_1 = arith.constant 0 : index
    %1 = vector.load %arg2[%c0_0, %c0_1] : memref<1x2048xf32, #tpu.memory_space<vmem>>, vector<1x2048xf32>
    %cst = arith.constant 0.000000e+00 : f32
    %2 = vector.broadcast %cst : f32 to vector<1x2048xf32>
    %3 = arith.maximumf %1, %2 : vector<1x2048xf32>
    %4 = vector.broadcast %0 : f32 to vector<1x2048xf32>
    %5 = arith.mulf %3, %4 : vector<1x2048xf32>
    %c0_2 = arith.constant 0 : index
    %c0_3 = arith.constant 0 : index
    %6 = vector.load %arg3[%c0_2, %c0_3] : memref<1x2048xf32, #tpu.memory_space<vmem>>, vector<1x2048xf32>
    tpu.vector_store %arg3[%c0_2, %c0_3], %5 {strides = array<i32>} : memref<1x2048xf32, #tpu.memory_space<vmem>>, vector<1x2048xf32>,
    return
  }
  func.func @transform_0(%arg0: i32) -> i32 {
    %c0_i32 = arith.constant 0 : i32
    %c0_i32_0 = arith.constant 0 : i32
    return %c0_i32 : i32
  }
  func.func @transform_1(%arg0: i32) -> (i32, i32) {
    %c0_i32 = arith.constant 0 : i32
    %c0_i32_0 = arith.constant 0 : i32
    return %arg0, %c0_i32 : i32, i32
  }
  func.func @transform_2(%arg0: i32) -> (i32, i32) {
    %c0_i32 = arith.constant 0 : i32
    %c0_i32_0 = arith.constant 0 : i32
    return %arg0, %c0_i32 : i32, i32
  }
}

</mosaic_0001>

<llo_original>
// kernel: tpu_custom_call.1
$region0: #{tpu_custom_call.1}
  #allocation0 [shape = 'u32[]', space=smem, size = 0x4, offset = 0x4, fixed_abs, tag = 'smem constant byte address 0x4 - core index']
  #allocation1 [shape = 'u32[144,128]{1,0:T(1,128)}', space=vmem, size = 0x12000, scoped, tag = 'internal scratch']
  #allocation2 [shape = 'f32[1]{0:T(128)S(6)}', space=smem, size = 0x200, scoped, tag = 'scoped memory for tpu_custom_call.1']
  %s0 = inlined_call_operand.<no memory space> [shape: f32[1], index: 0, kind: input, shape index: {}]
  %s1 = inlined_call_operand.hbm [shape: f32[1,2048], index: 1, kind: input, shape index: {}]
  %s2 = inlined_call_operand.hbm [shape: f32[1,2048], index: 2, kind: output, shape index: {}]
  %s3 = sld [smem:[#allocation0]]
  $region22: #{tpu_custom_call.1} parent=0
    _
  %s5 = ssub.s32 1, %s3
  %s6 = scalar_select 0, %s5, %s3
  %7 = sst [smem:[#allocation2]] %s0
  $region1: #{tpu_custom_call.1} parent=0
    #allocation3 [shape = 'u8[8192]{0}', space=vmem, size = 0x2000, scoped, tag = 'input window, operand 1, single buffered']
    #allocation4 [shape = 's32[1]{0}', space=sflag, size = 0x4, scoped, tag = 'scoped memory for tpu_custom_call.1']
    #allocation5 [shape = 's32[1]{0}', space=sflag, size = 0x4, scoped, tag = 'scoped memory for tpu_custom_call.1']
    #allocation6 [shape = 'u8[8192]{0}', space=vmem, size = 0x2000, scoped, tag = 'output window, operand 0, single buffered']
    %8 = vsyncpa [#allocation4], 0
    %9 = vsyncpa [#allocation5], 0
    // Predicated region
    $region2: #{tpu_custom_call.1} parent=1 // pred_check
      _
    $region3: #{tpu_custom_call.1} parent=1 // pred_check_branch
      %11 = sbr.rel (0) target = $region5
    $region4: #{tpu_custom_call.1} parent=1 // pred_region
      _
    $region5: #{tpu_custom_call.1} parent=1 // pred_fallthru
      _
    // Predicated region
    $region6: #{tpu_custom_call.1} parent=1 // pred_check
      _
    $region7: #{tpu_custom_call.1} parent=1 // pred_check_branch
      %13 = sbr.rel (0) target = $region9
    $region8: #{tpu_custom_call.1} parent=1 // pred_region
      %s15 = ssub.s32 256, 256
      %16 = vsyncadd [#allocation4], %s15
      %s18 = sshll.u32 [#allocation3], 4
      %s19 = int_to_ptr.vmem [resolvable:$true] %s18
      %21 = dma.hbm_to_vmem [thread:$0]  %s1, 256, %s19, [#allocation4]
    $region9: #{tpu_custom_call.1} parent=1 // pred_fallthru
      _
    // Predicated region
    $region10: #{tpu_custom_call.1} parent=1 // pred_check
      _
    $region11: #{tpu_custom_call.1} parent=1 // pred_check_branch
      %23 = sbr.rel (0) target = $region13
    $region12: #{tpu_custom_call.1} parent=1 // pred_region
      %24 = dma.done [#allocation4], 256
    $region13: #{tpu_custom_call.1} parent=1 // pred_fallthru
      _
    %s25 = sld [smem:[#allocation2]]
    %v26 = vld [vmem:[#allocation3] sm:$0xff]
    %v27 = vld [vmem:[#allocation3 + $0x8] sm:$0xff]
    %v28 = vmax.f32 %v26, 0.0
    %v29 = vmax.f32 %v27, 0.0
    %v30 = vstv %s25
    %v31 = vmul.f32 %v28, %v30
    %v32 = vmul.f32 %v29, %v30
    %33 = vst [vmem:[#allocation6] sm:$0xff] %v31
    %34 = vst [vmem:[#allocation6 + $0x8] sm:$0xff] %v32
    // Predicated region
    $region14: #{tpu_custom_call.1} parent=1 // pred_check
      _
    $region15: #{tpu_custom_call.1} parent=1 // pred_check_branch
      %36 = sbr.rel (0) target = $region17
    $region16: #{tpu_custom_call.1} parent=1 // pred_region
      %s38 = ssub.s32 256, 256
      %39 = vsyncadd [#allocation5], %s38
      %s41 = sshll.u32 [#allocation6], 4
      %s42 = int_to_ptr.vmem [resolvable:$true] %s41
      %44 = dma.vmem_to_hbm [thread:$0]  %s42, 256, %s2, [#allocation5]
    $region17: #{tpu_custom_call.1} parent=1 // pred_fallthru
      _
    // Predicated region
    $region18: #{tpu_custom_call.1} parent=1 // pred_check
      _
    $region19: #{tpu_custom_call.1} parent=1 // pred_check_branch
      %46 = sbr.rel (0) target = $region21
    $region20: #{tpu_custom_call.1} parent=1 // pred_region
      %47 = dma.done [#allocation5], 256
    $region21: #{tpu_custom_call.1} parent=1 // pred_fallthru
      _
    %48 = vsyncpa [#allocation4], 1
    %49 = vsyncpa [#allocation5], 1

</llo_original>
